<compile_context>
chip_gen: v7x
topology: tpu7x:2x2x1
jax: 0.10.0
libtpu: 0.0.40
codegen_flags: <defaults>
</compile_context>

<pallas_src>
import jax
import jax.numpy as jnp
from jax import lax
from jax.experimental import pallas as pl
from jax.experimental.pallas import tpu as pltpu

DROPOUT_P = 0.5   # F.dropout default
LANE = 128


def _round_up(n, m):
    return ((n + m - 1) // m) * m


def _keep_mask(shape, tile_seed_u32):
    """Bernoulli(keep=0.5) mask from a stateless counter hash (murmur-style).

    Works on both Mosaic TPU and the interpret fallback (plain jnp/lax ops
    only). One (TB, 2*HP) slab is drawn for both dropout layers.
    """
    r = lax.broadcasted_iota(jnp.uint32, shape, 0)
    c = lax.broadcasted_iota(jnp.uint32, shape, 1)
    x = r * jnp.uint32(shape[1]) + c + tile_seed_u32 * jnp.uint32(0x9E3779B9)
    x = x ^ (x >> 16)
    x = x * jnp.uint32(0x7FEB352D)
    x = x ^ (x >> 15)
    x = x * jnp.uint32(0x846CA68B)
    x = x ^ (x >> 16)
    # single unsigned compare against the sign bit -> keep prob 0.5
    return x < jnp.uint32(0x80000000)


def mlp_kernel(seed_ref, x_ref, w1_ref, b1_ref, w2_ref, b2_ref, w3_ref, b3_ref,
               o_ref):
    TB = x_ref.shape[0]
    HP = w1_ref.shape[1]

    # Independent dropout stream per batch tile (seed + program_id), drawn once
    # for both layers.
    tile_seed = (seed_ref[0] + pl.program_id(0)).astype(jnp.uint32)
    keep = _keep_mask((TB, 2 * HP), tile_seed)
    keep1 = keep[:, :HP]
    keep2 = keep[:, HP:]

    x = x_ref[...]                      # bf16, lane-dense

    # l1 + relu + dropout (1/(1-p) scale is folded into w2)
    h = jnp.dot(x, w1_ref[...], preferred_element_type=jnp.float32)
    h = h + b1_ref[...]
    h = jnp.maximum(h, 0.0)
    h = jnp.where(keep1, h, 0.0)

    # l2 + relu + dropout (1/(1-p) scale is folded into w3)
    h = jnp.dot(h.astype(jnp.bfloat16), w2_ref[...],
                preferred_element_type=jnp.float32)
    h = h + b2_ref[...]
    h = jnp.maximum(h, 0.0)
    h = jnp.where(keep2, h, 0.0)

    # l3
    out = jnp.dot(h.astype(jnp.bfloat16), w3_ref[...],
                  preferred_element_type=jnp.float32)
    out = out + b3_ref[...]
    o_ref[...] = out.astype(o_ref.dtype)


def init_params(key, input_size, hidden_size, num_classes):
    """nn.Linear-style U(-1/sqrt(fan_in), 1/sqrt(fan_in)) init, then:
    transpose to (in, out), fold dropout scale into w2/w3, zero-pad every
    feature dim to a multiple of 128, cast weights to bf16 (biases stay f32).
    """
    ks = jax.random.split(key, 6)

    def linear(kw, kb, fan_in, fan_out):
        bound = 1.0 / float(fan_in) ** 0.5
        w = jax.random.uniform(kw, (fan_in, fan_out), jnp.float32, -bound, bound)
        b = jax.random.uniform(kb, (fan_out,), jnp.float32, -bound, bound)
        return w, b

    w1, b1 = linear(ks[0], ks[1], input_size, hidden_size)
    w2, b2 = linear(ks[2], ks[3], hidden_size, hidden_size)
    w3, b3 = linear(ks[4], ks[5], 33, num_classes)   # l3 = nn.Linear(33, nc)

    # fold inverted-dropout scale into the consuming weight matrices (exact)
    scale = 1.0 / (1.0 - DROPOUT_P)
    w2 = w2 * scale
    w3 = w3 * scale

    IP = _round_up(input_size, LANE)
    HP = _round_up(hidden_size, LANE)
    CP = _round_up(num_classes, LANE)

    def pad2(a, r, c):
        out = jnp.zeros((r, c), a.dtype)
        return out.at[: a.shape[0], : a.shape[1]].set(a)

    w1p = pad2(w1, IP, HP).astype(jnp.bfloat16)
    w2p = pad2(w2, HP, HP).astype(jnp.bfloat16)
    w3p = pad2(w3, HP, CP).astype(jnp.bfloat16)
    b1p = pad2(b1[None, :], 1, HP)   # f32
    b2p = pad2(b2[None, :], 1, HP)   # f32
    b3p = pad2(b3[None, :], 1, CP)   # f32
    return (w1p, b1p, w2p, b2p, w3p, b3p)


def mlp_forward(x, params, num_classes, seed=0, block_batch=512):
    w1, b1, w2, b2, w3, b3 = params
    B, Fin = x.shape
    IP, HP = w1.shape
    CP = w3.shape[1]

    # batch tile: big enough to amortize per-step overhead, multiple of 8
    TB = min(block_batch, _round_up(B, 8))
    B_pad = _round_up(B, TB)

    x_p = jnp.zeros((B_pad, IP), dtype=jnp.bfloat16)
    x_p = x_p.at[:B, :Fin].set(x.astype(jnp.bfloat16))

    seed_arr = jnp.array([seed], dtype=jnp.int32)

    out = pl.pallas_call(
        mlp_kernel,
        out_shape=jax.ShapeDtypeStruct((B_pad, CP), jnp.float32),
        grid_spec=pltpu.PrefetchScalarGridSpec(
            num_scalar_prefetch=1,          # seed lands in SMEM
            grid=(B_pad // TB,),
            in_specs=[
                pl.BlockSpec((TB, IP), lambda i, seed: (i, 0)),  # x tile
                pl.BlockSpec((IP, HP), lambda i, seed: (0, 0)),  # w1 (resident)
                pl.BlockSpec((1, HP),  lambda i, seed: (0, 0)),  # b1
                pl.BlockSpec((HP, HP), lambda i, seed: (0, 0)),  # w2 (resident)
                pl.BlockSpec((1, HP),  lambda i, seed: (0, 0)),  # b2
                pl.BlockSpec((HP, CP), lambda i, seed: (0, 0)),  # w3 (resident)
                pl.BlockSpec((1, CP),  lambda i, seed: (0, 0)),  # b3
            ],
            out_specs=pl.BlockSpec((TB, CP), lambda i, seed: (i, 0)),
        ),
        compiler_params=pltpu.CompilerParams(
            dimension_semantics=("parallel",),   # v7x: shard batch across TCs
        ),
    )(seed_arr, x_p, w1, b1, w2, b2, w3, b3)

    # slice padded batch rows / padded class columns back off
    return out[:B, :num_classes]


if __name__ == "__main__":
    input_size = 32
    hidden_size = 33   # required by l3 = nn.Linear(33, num_classes)
    num_classes = 10
    batch = 8

    key = jax.random.PRNGKey(0)
    k_x, k_p = jax.random.split(key)

    x = jax.random.normal(k_x, (batch, input_size), dtype=jnp.float32)
    params = init_params(k_p, input_size, hidden_size, num_classes)

    out = mlp_forward(x, params, num_classes, seed=0)
    out = jax.block_until_ready(out)

    assert out.shape == (batch, num_classes), out.shape
    assert bool(jnp.all(jnp.isfinite(out)))
    print("KERNEL_OK")
</pallas_src>

<mosaic_0001>
module attributes {stable_mosaic.version = 11 : i64} {
  func.func @mlp_kernel(%arg0: i32, %arg1: memref<1xi32, #tpu.memory_space<smem>>, %arg2: memref<8x128xbf16, #tpu.memory_space<vmem>>, %arg3: memref<128x128xbf16, #tpu.memory_space<vmem>>, %arg4: memref<1x128xf32, #tpu.memory_space<vmem>>, %arg5: memref<128x128xbf16, #tpu.memory_space<vmem>>, %arg6: memref<1x128xf32, #tpu.memory_space<vmem>>, %arg7: memref<128x128xbf16, #tpu.memory_space<vmem>>, %arg8: memref<1x128xf32, #tpu.memory_space<vmem>>, %arg9: memref<8x128xf32, #tpu.memory_space<vmem>>) attributes {dimension_semantics = [#tpu.dimension_semantics<parallel>], iteration_bounds = array<i64: 1>, scalar_prefetch = 1 : i64, scratch_operands = 0 : i64, tpu.core_type = #tpu.core_type<tc>, window_params = [{transform_indices = @transform_0, window_bounds = array<i64: 8, 128>}, {pipeline_mode = #tpu.pipeline_mode<synchronous>, transform_indices = @transform_1, window_bounds = array<i64: 128, 128>}, {pipeline_mode = #tpu.pipeline_mode<synchronous>, transform_indices = @transform_2, window_bounds = array<i64: 1, 128>}, {pipeline_mode = #tpu.pipeline_mode<synchronous>, transform_indices = @transform_3, window_bounds = array<i64: 128, 128>}, {pipeline_mode = #tpu.pipeline_mode<synchronous>, transform_indices = @transform_4, window_bounds = array<i64: 1, 128>}, {pipeline_mode = #tpu.pipeline_mode<synchronous>, transform_indices = @transform_5, window_bounds = array<i64: 128, 128>}, {pipeline_mode = #tpu.pipeline_mode<synchronous>, transform_indices = @transform_6, window_bounds = array<i64: 1, 128>}, {transform_indices = @transform_7, window_bounds = array<i64: 8, 128>}]} {
    %c0 = arith.constant 0 : index
    %0 = memref.load %arg1[%c0] : memref<1xi32, #tpu.memory_space<smem>>
    %1 = arith.addi %0, %arg0 : i32
    %2 = tpu.iota {dimensions = array<i32: 0>} : vector<8x256xi32>
    %3 = tpu.iota {dimensions = array<i32: 1>} : vector<8x256xi32>
    %c256_i32 = arith.constant 256 : i32
    %4 = vector.broadcast %c256_i32 : i32 to vector<8x256xi32>
    %5 = arith.muli %2, %4 : vector<8x256xi32>
    %6 = arith.addi %5, %3 : vector<8x256xi32>
    %c-1640531527_i32 = arith.constant -1640531527 : i32
    %7 = arith.muli %1, %c-1640531527_i32 : i32
    %8 = vector.broadcast %7 : i32 to vector<8x256xi32>
    %9 = arith.addi %6, %8 : vector<8x256xi32>
    %c16_i32 = arith.constant 16 : i32
    %10 = vector.broadcast %c16_i32 : i32 to vector<8x256xi32>
    %11 = arith.shrui %9, %10 : vector<8x256xi32>
    %12 = arith.xori %9, %11 : vector<8x256xi32>
    %c2146121005_i32 = arith.constant 2146121005 : i32
    %13 = vector.broadcast %c2146121005_i32 : i32 to vector<8x256xi32>
    %14 = arith.muli %12, %13 : vector<8x256xi32>
    %c15_i32 = arith.constant 15 : i32
    %15 = vector.broadcast %c15_i32 : i32 to vector<8x256xi32>
    %16 = arith.shrui %14, %15 : vector<8x256xi32>
    %17 = arith.xori %14, %16 : vector<8x256xi32>
    %c-2073254261_i32 = arith.constant -2073254261 : i32
    %18 = vector.broadcast %c-2073254261_i32 : i32 to vector<8x256xi32>
    %19 = arith.muli %17, %18 : vector<8x256xi32>
    %c16_i32_0 = arith.constant 16 : i32
    %20 = vector.broadcast %c16_i32_0 : i32 to vector<8x256xi32>
    %21 = arith.shrui %19, %20 : vector<8x256xi32>
    %22 = arith.xori %19, %21 : vector<8x256xi32>
    %c-2147483648_i32 = arith.constant -2147483648 : i32
    %23 = vector.broadcast %c-2147483648_i32 : i32 to vector<8x256xi32>
    %24 = arith.cmpi ult, %22, %23 : vector<8x256xi32>
    %25 = vector.extract_strided_slice %24 {offsets = [0, 0], sizes = [8, 128], strides = [1, 1]} : vector<8x256xi1> to vector<8x128xi1>
    %26 = vector.extract_strided_slice %24 {offsets = [0, 128], sizes = [8, 128], strides = [1, 1]} : vector<8x256xi1> to vector<8x128xi1>
    %c0_1 = arith.constant 0 : index
    %c0_2 = arith.constant 0 : index
    %27 = vector.load %arg2[%c0_1, %c0_2] : memref<8x128xbf16, #tpu.memory_space<vmem>>, vector<8x128xbf16>
    %c0_3 = arith.constant 0 : index
    %c0_4 = arith.constant 0 : index
    %28 = vector.load %arg3[%c0_3, %c0_4] : memref<128x128xbf16, #tpu.memory_space<vmem>>, vector<128x128xbf16>
    %cst = arith.constant dense<0.000000e+00> : vector<8x128xf32>
    %29 = tpu.matmul %27, %28, %cst {dimension_numbers = #tpu.dot_dimension_numbers<[1], [0], [0], [1], [0, 0, 1, 1], [], []>} : vector<8x128xbf16>, vector<128x128xbf16>, vector<8x128xf32> -> vector<8x128xf32>
    %c0_5 = arith.constant 0 : index
    %c0_6 = arith.constant 0 : index
    %30 = vector.load %arg4[%c0_5, %c0_6] : memref<1x128xf32, #tpu.memory_space<vmem>>, vector<1x128xf32>
    %31 = vector.broadcast %30 : vector<1x128xf32> to vector<8x128xf32>
    %32 = arith.addf %29, %31 : vector<8x128xf32>
    %cst_7 = arith.constant 0.000000e+00 : f32
    %33 = vector.broadcast %cst_7 : f32 to vector<8x128xf32>
    %34 = arith.maximumf %32, %33 : vector<8x128xf32>
    %cst_8 = arith.constant 0.000000e+00 : f32
    %35 = vector.broadcast %cst_8 : f32 to vector<8x128xf32>
    %36 = arith.select %25, %34, %35 : vector<8x128xi1>, vector<8x128xf32>
    %37 = arith.truncf %36 : vector<8x128xf32> to vector<8x128xbf16>
    %c0_9 = arith.constant 0 : index
    %c0_10 = arith.constant 0 : index
    %38 = vector.load %arg5[%c0_9, %c0_10] : memref<128x128xbf16, #tpu.memory_space<vmem>>, vector<128x128xbf16>
    %cst_11 = arith.constant dense<0.000000e+00> : vector<8x128xf32>
    %39 = tpu.matmul %37, %38, %cst_11 {dimension_numbers = #tpu.dot_dimension_numbers<[1], [0], [0], [1], [0, 0, 1, 1], [], []>} : vector<8x128xbf16>, vector<128x128xbf16>, vector<8x128xf32> -> vector<8x128xf32>
    %c0_12 = arith.constant 0 : index
    %c0_13 = arith.constant 0 : index
    %40 = vector.load %arg6[%c0_12, %c0_13] : memref<1x128xf32, #tpu.memory_space<vmem>>, vector<1x128xf32>
    %41 = vector.broadcast %40 : vector<1x128xf32> to vector<8x128xf32>
    %42 = arith.addf %39, %41 : vector<8x128xf32>
    %cst_14 = arith.constant 0.000000e+00 : f32
    %43 = vector.broadcast %cst_14 : f32 to vector<8x128xf32>
    %44 = arith.maximumf %42, %43 : vector<8x128xf32>
    %cst_15 = arith.constant 0.000000e+00 : f32
    %45 = vector.broadcast %cst_15 : f32 to vector<8x128xf32>
    %46 = arith.select %26, %44, %45 : vector<8x128xi1>, vector<8x128xf32>
    %47 = arith.truncf %46 : vector<8x128xf32> to vector<8x128xbf16>
    %c0_16 = arith.constant 0 : index
    %c0_17 = arith.constant 0 : index
    %48 = vector.load %arg7[%c0_16, %c0_17] : memref<128x128xbf16, #tpu.memory_space<vmem>>, vector<128x128xbf16>
    %cst_18 = arith.constant dense<0.000000e+00> : vector<8x128xf32>
    %49 = tpu.matmul %47, %48, %cst_18 {dimension_numbers = #tpu.dot_dimension_numbers<[1], [0], [0], [1], [0, 0, 1, 1], [], []>} : vector<8x128xbf16>, vector<128x128xbf16>, vector<8x128xf32> -> vector<8x128xf32>
    %c0_19 = arith.constant 0 : index
    %c0_20 = arith.constant 0 : index
    %50 = vector.load %arg8[%c0_19, %c0_20] : memref<1x128xf32, #tpu.memory_space<vmem>>, vector<1x128xf32>
    %51 = vector.broadcast %50 : vector<1x128xf32> to vector<8x128xf32>
    %52 = arith.addf %49, %51 : vector<8x128xf32>
    %c0_21 = arith.constant 0 : index
    %c0_22 = arith.constant 0 : index
    %53 = vector.load %arg9[%c0_21, %c0_22] : memref<8x128xf32, #tpu.memory_space<vmem>>, vector<8x128xf32>
    tpu.vector_store %arg9[%c0_21, %c0_22], %52 {strides = array<i32>} : memref<8x128xf32, #tpu.memory_space<vmem>>, vector<8x128xf32>,
    return
  }
  func.func @transform_0(%arg0: i32, %arg1: memref<1xi32, #tpu.memory_space<smem>>) -> (i32, i32) {
    %c0_i32 = arith.constant 0 : i32
    %c0_i32_0 = arith.constant 0 : i32
    return %arg0, %c0_i32 : i32, i32
  }
  func.func @transform_1(%arg0: i32, %arg1: memref<1xi32, #tpu.memory_space<smem>>) -> (i32, i32) {
    %c0_i32 = arith.constant 0 : i32
    %c0_i32_0 = arith.constant 0 : i32
    %c0_i32_1 = arith.constant 0 : i32
    return %c0_i32, %c0_i32_0 : i32, i32
  }
  func.func @transform_2(%arg0: i32, %arg1: memref<1xi32, #tpu.memory_space<smem>>) -> (i32, i32) {
    %c0_i32 = arith.constant 0 : i32
    %c0_i32_0 = arith.constant 0 : i32
    %c0_i32_1 = arith.constant 0 : i32
    return %c0_i32, %c0_i32_0 : i32, i32
  }
  func.func @transform_3(%arg0: i32, %arg1: memref<1xi32, #tpu.memory_space<smem>>) -> (i32, i32) {
    %c0_i32 = arith.constant 0 : i32
    %c0_i32_0 = arith.constant 0 : i32
    %c0_i32_1 = arith.constant 0 : i32
    return %c0_i32, %c0_i32_0 : i32, i32
  }
  func.func @transform_4(%arg0: i32, %arg1: memref<1xi32, #tpu.memory_space<smem>>) -> (i32, i32) {
    %c0_i32 = arith.constant 0 : i32
    %c0_i32_0 = arith.constant 0 : i32
    %c0_i32_1 = arith.constant 0 : i32
    return %c0_i32, %c0_i32_0 : i32, i32
  }
  func.func @transform_5(%arg0: i32, %arg1: memref<1xi32, #tpu.memory_space<smem>>) -> (i32, i32) {
    %c0_i32 = arith.constant 0 : i32
    %c0_i32_0 = arith.constant 0 : i32
    %c0_i32_1 = arith.constant 0 : i32
    return %c0_i32, %c0_i32_0 : i32, i32
  }
  func.func @transform_6(%arg0: i32, %arg1: memref<1xi32, #tpu.memory_space<smem>>) -> (i32, i32) {
    %c0_i32 = arith.constant 0 : i32
    %c0_i32_0 = arith.constant 0 : i32
    %c0_i32_1 = arith.constant 0 : i32
    return %c0_i32, %c0_i32_0 : i32, i32
  }
  func.func @transform_7(%arg0: i32, %arg1: memref<1xi32, #tpu.memory_space<smem>>) -> (i32, i32) {
    %c0_i32 = arith.constant 0 : i32
    %c0_i32_0 = arith.constant 0 : i32
    return %arg0, %c0_i32 : i32, i32
  }
}

</mosaic_0001>

<llo_original>
// kernel: tpu_custom_call.1
$region0: #{tpu_custom_call.1}
  #allocation0 [shape = 'u32[]', space=smem, size = 0x4, offset = 0x4, fixed_abs, tag = 'smem constant byte address 0x4 - core index']
  #allocation1 [shape = 'u32[144,128]{1,0:T(1,128)}', space=vmem, size = 0x12000, scoped, tag = 'internal scratch']
  #allocation2 [shape = 's32[1]{0}', space=sflag, size = 0x4, scoped, tag = 'scoped memory for tpu_custom_call.1']
  #allocation3 [shape = 's32[1]{0:T(128)S(6)}', space=smem, size = 0x200, scoped, tag = 'prefetched SMEM operand 0']
  %s0 = inlined_call_operand.<no memory space> [shape: s32[1], index: 0, kind: input, shape index: {}]
  %s1 = inlined_call_operand.hbm [shape: bf16[8,128], index: 1, kind: input, shape index: {}]
  %s2 = inlined_call_operand.hbm [shape: bf16[128,128], index: 2, kind: input, shape index: {}]
  %s3 = inlined_call_operand.vmem [shape: f32[1,128], index: 3, kind: input, shape index: {}]
  %s4 = inlined_call_operand.hbm [shape: bf16[128,128], index: 4, kind: input, shape index: {}]
  %s5 = inlined_call_operand.vmem [shape: f32[1,128], index: 5, kind: input, shape index: {}]
  %s6 = inlined_call_operand.hbm [shape: bf16[128,128], index: 6, kind: input, shape index: {}]
  %s7 = inlined_call_operand.vmem [shape: f32[1,128], index: 7, kind: input, shape index: {}]
  %s8 = inlined_call_operand.hbm [shape: f32[8,128], index: 8, kind: output, shape index: {}]
  %s9 = sld [smem:[#allocation0]]
  $region54: #{tpu_custom_call.1} parent=0
    _
  %s11 = ssub.s32 1, %s9
  %s12 = scalar_select 0, %s11, %s9
  %13 = sst [smem:[#allocation3]] %s0
  $region1: #{tpu_custom_call.1} parent=0
    #allocation4 [shape = 'u8[2048]{0}', space=vmem, size = 0x800, scoped, tag = 'input window, operand 1, single buffered']
    #allocation5 [shape = 's32[1]{0}', space=sflag, size = 0x4, scoped, tag = 'scoped memory for tpu_custom_call.1']
    #allocation6 [shape = 's32[1]{0}', space=sflag, size = 0x4, scoped, tag = 'scoped memory for tpu_custom_call.1']
    #allocation7 [shape = 'u8[32768]{0}', space=vmem, size = 0x8000, scoped, tag = 'input window, operand 2, single buffered']
    #allocation8 [shape = 's32[1]{0}', space=sflag, size = 0x4, scoped, tag = 'scoped memory for tpu_custom_call.1']
    #allocation9 [shape = 'u8[32768]{0}', space=vmem, size = 0x8000, scoped, tag = 'input window, operand 4, single buffered']
    #allocation10 [shape = 'u8[32768]{0}', space=vmem, size = 0x8000, scoped, tag = 'input window, operand 6, single buffered']
    #allocation11 [shape = 's32[1]{0}', space=sflag, size = 0x4, scoped, tag = 'scoped memory for tpu_custom_call.1']
    #allocation12 [shape = 'u8[4096]{0}', space=vmem, size = 0x1000, scoped, tag = 'output window, operand 0, single buffered']
    %14 = vsyncpa [#allocation5], 0
    %15 = vsyncpa [#allocation8], 0
    %16 = vsyncpa [#allocation11], 0
    %17 = vsyncpa [#allocation6], 0
    // Predicated region
    $region2: #{tpu_custom_call.1} parent=1 // pred_check
      _
    $region3: #{tpu_custom_call.1} parent=1 // pred_check_branch
      %19 = sbr.rel (0) target = $region5
    $region4: #{tpu_custom_call.1} parent=1 // pred_region
      %s21 = ssub.s32 64, 64
      %22 = vsyncadd [#allocation5], %s21
      %s24 = sshll.u32 [#allocation4], 4
      %s25 = int_to_ptr.vmem [resolvable:$true] %s24
      %27 = dma.hbm_to_vmem [thread:$0]  %s1, 64, %s25, [#allocation5]
    $region5: #{tpu_custom_call.1} parent=1 // pred_fallthru
      _
    // Predicated region
    $region6: #{tpu_custom_call.1} parent=1 // pred_check
      _
    $region7: #{tpu_custom_call.1} parent=1 // pred_check_branch
      %29 = sbr.rel (0) target = $region9
    $region8: #{tpu_custom_call.1} parent=1 // pred_region
      %s31 = ssub.s32 1024, 1024
      %32 = vsyncadd [#allocation8], %s31
      %s33 = sshll.u32 [#allocation7], 4
      %s34 = int_to_ptr.vmem [resolvable:$true] %s33
      %39 = dma.hbm_to_vmem [thread:$0]  %s2, 1024, %s34, [#allocation8], 64, 64, 4
    $region9: #{tpu_custom_call.1} parent=1 // pred_fallthru
      _
    // Predicated region
    $region10: #{tpu_custom_call.1} parent=1 // pred_check
      _
    $region11: #{tpu_custom_call.1} parent=1 // pred_check_branch
      %41 = sbr.rel (0) target = $region13
    $region12: #{tpu_custom_call.1} parent=1 // pred_region
      _
    $region13: #{tpu_custom_call.1} parent=1 // pred_fallthru
      _
    // Predicated region
    $region14: #{tpu_custom_call.1} parent=1 // pred_check
      _
    $region15: #{tpu_custom_call.1} parent=1 // pred_check_branch
      %43 = sbr.rel (0) target = $region17
    $region16: #{tpu_custom_call.1} parent=1 // pred_region
      %s45 = ssub.s32 1024, 1024
      %46 = vsyncadd [#allocation8], %s45
      %s47 = sshll.u32 [#allocation9], 4
      %s48 = int_to_ptr.vmem [resolvable:$true] %s47
      %53 = dma.hbm_to_vmem [thread:$0]  %s4, 1024, %s48, [#allocation8], 64, 64, 4
    $region17: #{tpu_custom_call.1} parent=1 // pred_fallthru
      _
    // Predicated region
    $region18: #{tpu_custom_call.1} parent=1 // pred_check
      _
    $region19: #{tpu_custom_call.1} parent=1 // pred_check_branch
      %55 = sbr.rel (0) target = $region21
    $region20: #{tpu_custom_call.1} parent=1 // pred_region
      _
    $region21: #{tpu_custom_call.1} parent=1 // pred_fallthru
      _
    // Predicated region
    $region22: #{tpu_custom_call.1} parent=1 // pred_check
      _
    $region23: #{tpu_custom_call.1} parent=1 // pred_check_branch
      %57 = sbr.rel (0) target = $region25
    $region24: #{tpu_custom_call.1} parent=1 // pred_region
      %s59 = ssub.s32 1024, 1024
      %60 = vsyncadd [#allocation11], %s59
      %s61 = sshll.u32 [#allocation10], 4
      %s62 = int_to_ptr.vmem [resolvable:$true] %s61
      %67 = dma.hbm_to_vmem [thread:$0]  %s6, 1024, %s62, [#allocation11], 64, 64, 4
    $region25: #{tpu_custom_call.1} parent=1 // pred_fallthru
      _
    // Predicated region
    $region26: #{tpu_custom_call.1} parent=1 // pred_check
      _
    $region27: #{tpu_custom_call.1} parent=1 // pred_check_branch
      %69 = sbr.rel (0) target = $region29
    $region28: #{tpu_custom_call.1} parent=1 // pred_region
      _
    $region29: #{tpu_custom_call.1} parent=1 // pred_fallthru
      _
    // Predicated region
    $region30: #{tpu_custom_call.1} parent=1 // pred_check
      _
    $region31: #{tpu_custom_call.1} parent=1 // pred_check_branch
      %71 = sbr.rel (0) target = $region33
    $region32: #{tpu_custom_call.1} parent=1 // pred_region
      %72 = dma.done [#allocation5], 64
    $region33: #{tpu_custom_call.1} parent=1 // pred_fallthru
      _
    // Predicated region
    $region34: #{tpu_custom_call.1} parent=1 // pred_check
      _
    $region35: #{tpu_custom_call.1} parent=1 // pred_check_branch
      %74 = sbr.rel (0) target = $region37
    $region36: #{tpu_custom_call.1} parent=1 // pred_region
      %75 = dma.done [#allocation8], 1024
    $region37: #{tpu_custom_call.1} parent=1 // pred_fallthru
      _
    // Predicated region
    $region38: #{tpu_custom_call.1} parent=1 // pred_check
      _
    $region39: #{tpu_custom_call.1} parent=1 // pred_check_branch
      %77 = sbr.rel (0) target = $region41
    $region40: #{tpu_custom_call.1} parent=1 // pred_region
      %78 = dma.done [#allocation8], 1024
    $region41: #{tpu_custom_call.1} parent=1 // pred_fallthru
      _
    // Predicated region
    $region42: #{tpu_custom_call.1} parent=1 // pred_check
      _
    $region43: #{tpu_custom_call.1} parent=1 // pred_check_branch
      %80 = sbr.rel (0) target = $region45
    $region44: #{tpu_custom_call.1} parent=1 // pred_region
      %81 = dma.done [#allocation11], 1024
    $region45: #{tpu_custom_call.1} parent=1 // pred_fallthru
      _
    %s83 = sld [smem:[#allocation3]]
    %s84 = sadd.s32 %s83, 0
    %v85 = vlaneseq
    %v86 = vshrl.u32 %v85, 7
    %v87 = vlaneseq
    %v88 = vand.u32 %v87, 127
    %v89 = vadd.s32 %v88, 128
    %v90 = vmul.u32 %v86, 256
    %v91 = vadd.s32 %v90, %v88
    %v92 = vadd.s32 %v90, %v89
    %s93 = smul.u32 %s84, 2654435769
    %v94 = vstv %s93
    %v95 = vadd.s32 %v91, %v94
    %v96 = vadd.s32 %v92, %v94
    %v97 = vshrl.u32 %v95, 16
    %v98 = vshrl.u32 %v96, 16
    %v99 = vxor.u32 %v95, %v97
    %v100 = vxor.u32 %v96, %v98
    %v101 = vmul.u32 %v99, 2146121005
    %v102 = vmul.u32 %v100, 2146121005
    %v103 = vshrl.u32 %v101, 15
    %v104 = vshrl.u32 %v102, 15
    %v105 = vxor.u32 %v101, %v103
    %v106 = vxor.u32 %v102, %v104
    %v107 = vmul.u32 %v105, 2221713035
    %v108 = vmul.u32 %v106, 2221713035
    %v109 = vshrl.u32 %v107, 16
    %v110 = vshrl.u32 %v108, 16
    %v111 = vxor.u32 %v107, %v109
    %v112 = vxor.u32 %v108, %v110
    %vm113 = vcmp.lt.u32.totalorder %v111, 2147483648
    %vm114 = vcmp.lt.u32.totalorder %v112, 2147483648
    %v115 = vld [vmem:[#allocation4] sm:$0xf]
    %v116 = vld [vmem:[#allocation7] sm:$0xf]
    %v117 = vld [vmem:[#allocation7 + $0x4] sm:$0xf]
    %v118 = vld [vmem:[#allocation7 + $0x8] sm:$0xf]
    %v119 = vld [vmem:[#allocation7 + $0xc] sm:$0xf]
    %v120 = vld [vmem:[#allocation7 + $0x10] sm:$0xf]
    %v121 = vld [vmem:[#allocation7 + $0x14] sm:$0xf]
    %v122 = vld [vmem:[#allocation7 + $0x18] sm:$0xf]
    %v123 = vld [vmem:[#allocation7 + $0x1c] sm:$0xf]
    %v124 = vld [vmem:[#allocation7 + $0x20] sm:$0xf]
    %v125 = vld [vmem:[#allocation7 + $0x24] sm:$0xf]
    %v126 = vld [vmem:[#allocation7 + $0x28] sm:$0xf]
    %v127 = vld [vmem:[#allocation7 + $0x2c] sm:$0xf]
    %v128 = vld [vmem:[#allocation7 + $0x30] sm:$0xf]
    %v129 = vld [vmem:[#allocation7 + $0x34] sm:$0xf]
    %v130 = vld [vmem:[#allocation7 + $0x38] sm:$0xf]
    %v131 = vld [vmem:[#allocation7 + $0x3c] sm:$0xf]
    %v132 = vld [vmem:[%s3] sm:$0x1]
    %v134 = vlaneseq
    %v135 = vshrl.u32 %v134, 7
    %v136 = vsub.s32 0, %v135
    %v137 = vrot.slane %v132, %v136
    %v155 = vunpack.c.l.b16 %v116
    %v156 = vunpack.c.l.b16 %v117
    %v157 = vunpack.c.l.b16 %v118
    %v158 = vunpack.c.l.b16 %v119
    %v159 = vunpack.c.l.b16 %v120
    %v160 = vunpack.c.l.b16 %v121
    %v161 = vunpack.c.l.b16 %v122
    %v162 = vunpack.c.l.b16 %v123
    %v163 = vunpack.c.l.b16 %v124
    %v164 = vunpack.c.l.b16 %v125
    %v165 = vunpack.c.l.b16 %v126
    %v166 = vunpack.c.l.b16 %v127
    %v167 = vunpack.c.l.b16 %v128
    %v168 = vunpack.c.l.b16 %v129
    %v169 = vunpack.c.l.b16 %v130
    %v170 = vunpack.c.l.b16 %v131
    %v171 = vpack.c.b16 %v156, %v155
    %v172 = vpack.c.b16 %v158, %v157
    %v173 = vpack.c.b16 %v160, %v159
    %v174 = vpack.c.b16 %v162, %v161
    %v175 = vpack.c.b16 %v164, %v163
    %v176 = vpack.c.b16 %v166, %v165
    %v177 = vpack.c.b16 %v168, %v167
    %v178 = vpack.c.b16 %v170, %v169
    %187 = vmatprep.subr.bf16.mxu0 0
    %188 = vmatpush1.bf16.msra.mxu0 %v171
    %189 = vmatprep.subr.bf16.mxu0 0
    %190 = vmatpush1.bf16.msra.mxu0 %v172
    %191 = vmatprep.subr.bf16.mxu0 0
    %192 = vmatpush1.bf16.msra.mxu0 %v173
    %193 = vmatprep.subr.bf16.mxu0 0
    %194 = vmatpush1.bf16.msra.mxu0 %v174
    %195 = vmatprep.subr.bf16.mxu0 0
    %196 = vmatpush1.bf16.msra.mxu0 %v175
    %197 = vmatprep.subr.bf16.mxu0 0
    %198 = vmatpush1.bf16.msra.mxu0 %v176
    %199 = vmatprep.subr.bf16.mxu0 0
    %200 = vmatpush1.bf16.msra.mxu0 %v177
    %201 = vmatprep.subr.bf16.mxu0 0
    %202 = vmatpush1.bf16.msra.mxu0 %v178
    %203 = vmatprep.subr.bf16.mxu0 0
    %204 = vmatpush1.bf16.msra.mxu0 0
    %205 = vmatprep.subr.bf16.mxu0 0
    %206 = vmatpush1.bf16.msra.mxu0 0
    %207 = vmatprep.subr.bf16.mxu0 0
    %208 = vmatpush1.bf16.msra.mxu0 0
    %209 = vmatprep.subr.bf16.mxu0 0
    %210 = vmatpush1.bf16.msra.mxu0 0
    %211 = vmatprep.subr.bf16.mxu0 0
    %212 = vmatpush1.bf16.msra.mxu0 0
    %213 = vmatprep.subr.bf16.mxu0 0
    %214 = vmatpush1.bf16.msra.mxu0 0
    %215 = vmatprep.subr.bf16.mxu0 0
    %216 = vmatpush1.bf16.msra.mxu0 0
    %217 = vmatprep.subr.bf16.mxu0 0
    %218 = vmatpush1.bf16.msra.mxu0 0
    %219 = vmatprep.mubr.bf16.mxu0 0
    %220 = vmatmul.mubr.bf16.gmra.mrb[0].mxu0 %v115
    %v221 = vpop.f32.mrb[0].mxu0
    %v222 = vadd.f32 %v137, %v221
    %v223 = vpop.f32.mrb[0].mxu0
    %v224 = vpop.f32.mrb[0].mxu0
    %v225 = vpop.f32.mrb[0].mxu0
    %226 = vdwg.mxu0
    %v227 = vmax.f32 %v222, 0.0
    %v228 = vsel %vm113, %v227, 0.0
    %v229 = vpack.c.bf16 %v228, %v228
    %v230 = vld [vmem:[#allocation9] sm:$0xf]
    %v231 = vld [vmem:[#allocation9 + $0x4] sm:$0xf]
    %v232 = vld [vmem:[#allocation9 + $0x8] sm:$0xf]
    %v233 = vld [vmem:[#allocation9 + $0xc] sm:$0xf]
    %v234 = vld [vmem:[#allocation9 + $0x10] sm:$0xf]
    %v235 = vld [vmem:[#allocation9 + $0x14] sm:$0xf]
    %v236 = vld [vmem:[#allocation9 + $0x18] sm:$0xf]
    %v237 = vld [vmem:[#allocation9 + $0x1c] sm:$0xf]
    %v238 = vld [vmem:[#allocation9 + $0x20] sm:$0xf]
    %v239 = vld [vmem:[#allocation9 + $0x24] sm:$0xf]
    %v240 = vld [vmem:[#allocation9 + $0x28] sm:$0xf]
    %v241 = vld [vmem:[#allocation9 + $0x2c] sm:$0xf]
    %v242 = vld [vmem:[#allocation9 + $0x30] sm:$0xf]
    %v243 = vld [vmem:[#allocation9 + $0x34] sm:$0xf]
    %v244 = vld [vmem:[#allocation9 + $0x38] sm:$0xf]
    %v245 = vld [vmem:[#allocation9 + $0x3c] sm:$0xf]
    %v246 = vld [vmem:[%s5] sm:$0x1]
    %v248 = vlaneseq
    %v249 = vshrl.u32 %v248, 7
    %v250 = vsub.s32 0, %v249
    %v251 = vrot.slane %v246, %v250
    %v269 = vunpack.c.l.b16 %v230
    %v270 = vunpack.c.l.b16 %v231
    %v271 = vunpack.c.l.b16 %v232
    %v272 = vunpack.c.l.b16 %v233
    %v273 = vunpack.c.l.b16 %v234
    %v274 = vunpack.c.l.b16 %v235
    %v275 = vunpack.c.l.b16 %v236
    %v276 = vunpack.c.l.b16 %v237
    %v277 = vunpack.c.l.b16 %v238
    %v278 = vunpack.c.l.b16 %v239
    %v279 = vunpack.c.l.b16 %v240
    %v280 = vunpack.c.l.b16 %v241
    %v281 = vunpack.c.l.b16 %v242
    %v282 = vunpack.c.l.b16 %v243
    %v283 = vunpack.c.l.b16 %v244
    %v284 = vunpack.c.l.b16 %v245
    %v285 = vpack.c.b16 %v270, %v269
    %v286 = vpack.c.b16 %v272, %v271
    %v287 = vpack.c.b16 %v274, %v273
    %v288 = vpack.c.b16 %v276, %v275
    %v289 = vpack.c.b16 %v278, %v277
    %v290 = vpack.c.b16 %v280, %v279
    %v291 = vpack.c.b16 %v282, %v281
    %v292 = vpack.c.b16 %v284, %v283
    %301 = vmatprep.subr.bf16.mxu0 0
    %302 = vmatpush1.bf16.msra.mxu0 %v285
    %303 = vmatprep.subr.bf16.mxu0 0
    %304 = vmatpush1.bf16.msra.mxu0 %v286
    %305 = vmatprep.subr.bf16.mxu0 0
    %306 = vmatpush1.bf16.msra.mxu0 %v287
    %307 = vmatprep.subr.bf16.mxu0 0
    %308 = vmatpush1.bf16.msra.mxu0 %v288
    %309 = vmatprep.subr.bf16.mxu0 0
    %310 = vmatpush1.bf16.msra.mxu0 %v289
    %311 = vmatprep.subr.bf16.mxu0 0
    %312 = vmatpush1.bf16.msra.mxu0 %v290
    %313 = vmatprep.subr.bf16.mxu0 0
    %314 = vmatpush1.bf16.msra.mxu0 %v291
    %315 = vmatprep.subr.bf16.mxu0 0
    %316 = vmatpush1.bf16.msra.mxu0 %v292
    %317 = vmatprep.subr.bf16.mxu0 0
    %318 = vmatpush1.bf16.msra.mxu0 0
    %319 = vmatprep.subr.bf16.mxu0 0
    %320 = vmatpush1.bf16.msra.mxu0 0
    %321 = vmatprep.subr.bf16.mxu0 0
    %322 = vmatpush1.bf16.msra.mxu0 0
    %323 = vmatprep.subr.bf16.mxu0 0
    %324 = vmatpush1.bf16.msra.mxu0 0
    %325 = vmatprep.subr.bf16.mxu0 0
    %326 = vmatpush1.bf16.msra.mxu0 0
    %327 = vmatprep.subr.bf16.mxu0 0
    %328 = vmatpush1.bf16.msra.mxu0 0
    %329 = vmatprep.subr.bf16.mxu0 0
    %330 = vmatpush1.bf16.msra.mxu0 0
    %331 = vmatprep.subr.bf16.mxu0 0
    %332 = vmatpush1.bf16.msra.mxu0 0
    %333 = vmatprep.mubr.bf16.mxu0 0
    %334 = vmatmul.mubr.bf16.gmra.mrb[0].mxu0 %v229
    %v335 = vpop.f32.mrb[0].mxu0
    %v336 = vadd.f32 %v251, %v335
    %v337 = vpop.f32.mrb[0].mxu0
    %v338 = vpop.f32.mrb[0].mxu0
    %v339 = vpop.f32.mrb[0].mxu0
    %340 = vdwg.mxu0
    %v341 = vmax.f32 %v336, 0.0
    %v342 = vsel %vm114, %v341, 0.0
    %v343 = vpack.c.bf16 %v342, %v342
    %v344 = vld [vmem:[#allocation10] sm:$0xf]
    %v345 = vld [vmem:[#allocation10 + $0x4] sm:$0xf]
    %v346 = vld [vmem:[#allocation10 + $0x8] sm:$0xf]
    %v347 = vld [vmem:[#allocation10 + $0xc] sm:$0xf]
    %v348 = vld [vmem:[#allocation10 + $0x10] sm:$0xf]
    %v349 = vld [vmem:[#allocation10 + $0x14] sm:$0xf]
    %v350 = vld [vmem:[#allocation10 + $0x18] sm:$0xf]
    %v351 = vld [vmem:[#allocation10 + $0x1c] sm:$0xf]
    %v352 = vld [vmem:[#allocation10 + $0x20] sm:$0xf]
    %v353 = vld [vmem:[#allocation10 + $0x24] sm:$0xf]
    %v354 = vld [vmem:[#allocation10 + $0x28] sm:$0xf]
    %v355 = vld [vmem:[#allocation10 + $0x2c] sm:$0xf]
    %v356 = vld [vmem:[#allocation10 + $0x30] sm:$0xf]
    %v357 = vld [vmem:[#allocation10 + $0x34] sm:$0xf]
    %v358 = vld [vmem:[#allocation10 + $0x38] sm:$0xf]
    %v359 = vld [vmem:[#allocation10 + $0x3c] sm:$0xf]
    %v360 = vld [vmem:[%s7] sm:$0x1]
    %v362 = vlaneseq
    %v363 = vshrl.u32 %v362, 7
    %v364 = vsub.s32 0, %v363
    %v365 = vrot.slane %v360, %v364
    %v383 = vunpack.c.l.b16 %v344
    %v384 = vunpack.c.l.b16 %v345
    %v385 = vunpack.c.l.b16 %v346
    %v386 = vunpack.c.l.b16 %v347
    %v387 = vunpack.c.l.b16 %v348
    %v388 = vunpack.c.l.b16 %v349
    %v389 = vunpack.c.l.b16 %v350
    %v390 = vunpack.c.l.b16 %v351
    %v391 = vunpack.c.l.b16 %v352
    %v392 = vunpack.c.l.b16 %v353
    %v393 = vunpack.c.l.b16 %v354
    %v394 = vunpack.c.l.b16 %v355
    %v395 = vunpack.c.l.b16 %v356
    %v396 = vunpack.c.l.b16 %v357
    %v397 = vunpack.c.l.b16 %v358
    %v398 = vunpack.c.l.b16 %v359
    %v399 = vpack.c.b16 %v384, %v383
    %v400 = vpack.c.b16 %v386, %v385
    %v401 = vpack.c.b16 %v388, %v387
    %v402 = vpack.c.b16 %v390, %v389
    %v403 = vpack.c.b16 %v392, %v391
    %v404 = vpack.c.b16 %v394, %v393
    %v405 = vpack.c.b16 %v396, %v395
    %v406 = vpack.c.b16 %v398, %v397
    %415 = vmatprep.subr.bf16.mxu0 0
    %416 = vmatpush1.bf16.msra.mxu0 %v399
    %417 = vmatprep.subr.bf16.mxu0 0
    %418 = vmatpush1.bf16.msra.mxu0 %v400
    %419 = vmatprep.subr.bf16.mxu0 0
    %420 = vmatpush1.bf16.msra.mxu0 %v401
    %421 = vmatprep.subr.bf16.mxu0 0
    %422 = vmatpush1.bf16.msra.mxu0 %v402
    %423 = vmatprep.subr.bf16.mxu0 0
    %424 = vmatpush1.bf16.msra.mxu0 %v403
    %425 = vmatprep.subr.bf16.mxu0 0
    %426 = vmatpush1.bf16.msra.mxu0 %v404
    %427 = vmatprep.subr.bf16.mxu0 0
    %428 = vmatpush1.bf16.msra.mxu0 %v405
    %429 = vmatprep.subr.bf16.mxu0 0
    %430 = vmatpush1.bf16.msra.mxu0 %v406
    %431 = vmatprep.subr.bf16.mxu0 0
    %432 = vmatpush1.bf16.msra.mxu0 0
    %433 = vmatprep.subr.bf16.mxu0 0
    %434 = vmatpush1.bf16.msra.mxu0 0
    %435 = vmatprep.subr.bf16.mxu0 0
    %436 = vmatpush1.bf16.msra.mxu0 0
    %437 = vmatprep.subr.bf16.mxu0 0
    %438 = vmatpush1.bf16.msra.mxu0 0
    %439 = vmatprep.subr.bf16.mxu0 0
    %440 = vmatpush1.bf16.msra.mxu0 0
    %441 = vmatprep.subr.bf16.mxu0 0
    %442 = vmatpush1.bf16.msra.mxu0 0
    %443 = vmatprep.subr.bf16.mxu0 0
    %444 = vmatpush1.bf16.msra.mxu0 0
    %445 = vmatprep.subr.bf16.mxu0 0
    %446 = vmatpush1.bf16.msra.mxu0 0
    %447 = vmatprep.mubr.bf16.mxu0 0
    %448 = vmatmul.mubr.bf16.gmra.mrb[0].mxu0 %v343
    %v449 = vpop.f32.mrb[0].mxu0
    %v450 = vadd.f32 %v365, %v449
    %v451 = vpop.f32.mrb[0].mxu0
    %v452 = vpop.f32.mrb[0].mxu0
    %v453 = vpop.f32.mrb[0].mxu0
    %454 = vdwg.mxu0
    %455 = vst [vmem:[#allocation12] sm:$0xff] %v450
    // Predicated region
    $region46: #{tpu_custom_call.1} parent=1 // pred_check
      _
    $region47: #{tpu_custom_call.1} parent=1 // pred_check_branch
      %457 = sbr.rel (0) target = $region49
    $region48: #{tpu_custom_call.1} parent=1 // pred_region
      %s459 = ssub.s32 128, 128
      %460 = vsyncadd [#allocation6], %s459
      %s462 = sshll.u32 [#allocation12], 4
      %s463 = int_to_ptr.vmem [resolvable:$true] %s462
      %465 = dma.vmem_to_hbm [thread:$0]  %s463, 128, %s8, [#allocation6]
    $region49: #{tpu_custom_call.1} parent=1 // pred_fallthru
      _
    // Predicated region
    $region50: #{tpu_custom_call.1} parent=1 // pred_check
      _
    $region51: #{tpu_custom_call.1} parent=1 // pred_check_branch
      %467 = sbr.rel (0) target = $region53
    $region52: #{tpu_custom_call.1} parent=1 // pred_region
      %468 = dma.done [#allocation6], 128
    $region53: #{tpu_custom_call.1} parent=1 // pred_fallthru
      _
    %469 = vsyncpa [#allocation5], 1
    %470 = vsyncpa [#allocation8], 1
    %471 = vsyncpa [#allocation11], 1
    %472 = vsyncpa [#allocation6], 1

</llo_original>
